<compile_context>
chip_gen: v6e
topology: v6e:2x2x1
jax: 0.10.0
libtpu: 0.0.40
codegen_flags: <defaults>
</compile_context>

<pallas_src>
import jax
import jax.numpy as jnp
from jax.experimental import pallas as pl
from jax.experimental.pallas import tpu as pltpu


def _mlp_kernel(x_ref, w1_ref, b1_ref, w2_ref, b2_ref, out_ref):
    # x_ref : [TILE_N, F]   (f32 or bf16)
    # w1_ref: [F, H]        b1_ref: [1, H]
    # w2_ref: [1, H]        (fc2 weight laid out as a row vector)
    # b2_ref: [1, 1]        (SMEM scalar)
    # out_ref: [1, TILE_N]  (lane-dense: batch on the lane axis)
    h = jnp.dot(x_ref[...], w1_ref[...], preferred_element_type=jnp.float32)
    h = jnp.maximum(h + b1_ref[...].astype(jnp.float32), 0.0)
    # fc2 as w2_row @ h^T (contract both H axes, same pattern as q@k^T) so the
    # result lands with batch on lanes -> unmasked, contiguous stores.
    z = jnp.einsum(
        "oh,nh->on",
        w2_ref[...].astype(jnp.float32),
        h,
        preferred_element_type=jnp.float32,
    )
    z = z + b2_ref[0, 0]
    out_ref[...] = jax.nn.sigmoid(z).astype(out_ref.dtype)


def _pick_tile_n(n, f, itemsize):
    """Row-tile size: ~4 MiB per x buffer, balanced across tiles, 128-aligned."""
    budget = 8 * 1024 * 1024                      # 2 pipeline buffers of the x tile
    rows = budget // max(1, 2 * f * itemsize)
    rows = max(128, min(32768, (rows // 128) * 128))
    if n <= rows:
        # Single tile covering the whole batch exactly -> no padding, block
        # shape equals the full array dims (always a legal BlockSpec).
        return n
    num_tiles = pl.cdiv(n, rows)
    # Re-split evenly so tiles are balanced (helps v7x 2-TC sharding) and the
    # final partial block is as small as possible.
    return ((pl.cdiv(n, num_tiles) + 127) // 128) * 128


def neural_binary_classifier_forward(x, w1, b1, w2, b2, *, tile_n=None):
    """x: [N, F]; w1: [F, H] (= fc1.weight.T); b1: [H];
    w2: [H, 1] (= fc2.weight.T); b2: [1]  ->  [N, 1] float32 probabilities."""
    n, f = x.shape
    hdim = w1.shape[1]
    if tile_n is None:
        tile_n = _pick_tile_n(n, f, x.dtype.itemsize)
    num_tiles = pl.cdiv(n, tile_n)

    b1r = b1.reshape(1, hdim)
    w2r = w2.reshape(1, hdim)                     # [H,1] -> [1,H] row vector
    b2r = b2.reshape(1, 1).astype(jnp.float32)    # SMEM scalar

    out = pl.pallas_call(
        _mlp_kernel,
        out_shape=jax.ShapeDtypeStruct((num_tiles, tile_n), jnp.float32),
        grid_spec=pltpu.PrefetchScalarGridSpec(
            num_scalar_prefetch=0,
            grid=(num_tiles,),
            in_specs=[
                pl.BlockSpec((tile_n, f), lambda i: (i, 0)),   # x: streamed tiles
                pl.BlockSpec((f, hdim), lambda i: (0, 0)),     # w1: VMEM-resident
                pl.BlockSpec((1, hdim), lambda i: (0, 0)),     # b1: VMEM-resident
                pl.BlockSpec((1, hdim), lambda i: (0, 0)),     # w2 row: resident
                pl.BlockSpec(memory_space=pltpu.MemorySpace.SMEM),  # b2 scalar
            ],
            out_specs=pl.BlockSpec((1, tile_n), lambda i: (i, 0)),
        ),
        compiler_params=pltpu.CompilerParams(
            dimension_semantics=("parallel",),    # v7x: shard tiles across 2 TCs
            vmem_limit_bytes=32 * 1024 * 1024,
        ),
        cost_estimate=pl.CostEstimate(
            flops=2 * n * f * hdim + 2 * n * hdim,
            transcendentals=n,
            bytes_accessed=(n * f + f * hdim + 2 * hdim + 1) * x.dtype.itemsize
            + n * 4,
        ),
    )(x, w1, b1r, w2r, b2r)

    # Lane-dense (num_tiles, TILE_N) slab -> (N, 1); rows beyond N (garbage from
    # the partial final block, if any) are sliced off here.
    return out.reshape(num_tiles * tile_n, 1)[:n]


if __name__ == "__main__":
    # Small shapes consistent with the module: batch=8, features=32, hidden=16.
    N, F, H = 8, 32, 16

    key = jax.random.PRNGKey(0)
    kx, kw1, kb1, kw2, kb2 = jax.random.split(key, 5)

    x = jax.random.normal(kx, (N, F), dtype=jnp.float32)

    # Deterministic parameter init (PyTorch Linear-style uniform bounds).
    bound1 = 1.0 / (F ** 0.5)
    w1 = jax.random.uniform(kw1, (F, H), jnp.float32, -bound1, bound1)   # fc1.weight^T
    b1 = jax.random.uniform(kb1, (H,), jnp.float32, -bound1, bound1)     # fc1.bias
    bound2 = 1.0 / (H ** 0.5)
    w2 = jax.random.uniform(kw2, (H, 1), jnp.float32, -bound2, bound2)   # fc2.weight^T
    b2 = jax.random.uniform(kb2, (1,), jnp.float32, -bound2, bound2)     # fc2.bias

    # Pure-JAX reference.
    ref = jax.nn.sigmoid(jnp.maximum(x @ w1 + b1, 0.0) @ w2 + b2)

    # f32 path.
    out = jax.block_until_ready(neural_binary_classifier_forward(x, w1, b1, w2, b2))
    assert out.shape == (N, 1)
    assert jnp.allclose(out, ref, atol=1e-5, rtol=1e-5)

    # bf16-input path (v6e / v7x: halves the dominant HBM read traffic;
    # MXU still accumulates in f32, elementwise math stays f32).
    out_bf16 = jax.block_until_ready(
        neural_binary_classifier_forward(
            x.astype(jnp.bfloat16), w1.astype(jnp.bfloat16), b1, w2, b2
        )
    )
    assert out_bf16.shape == (N, 1)
    assert jnp.allclose(out_bf16, ref, atol=2e-2, rtol=0)

    # TODO(synk): fit()/predict()/score() (Adam + BCELoss training loop) are host-side
    # sklearn-style utilities, not part of the forward pass, and are not translated.

    print("KERNEL_OK")
</pallas_src>

<mosaic_0001>
module attributes {stable_mosaic.version = 11 : i64} {
  func.func @_mlp_kernel(%arg0: i32, %arg1: memref<8x32xf32, #tpu.memory_space<vmem>>, %arg2: memref<32x16xf32, #tpu.memory_space<vmem>>, %arg3: memref<1x16xf32, #tpu.memory_space<vmem>>, %arg4: memref<1x16xf32, #tpu.memory_space<vmem>>, %arg5: memref<1x1xf32, #tpu.memory_space<smem>>, %arg6: memref<1x8xf32, #tpu.memory_space<vmem>>) attributes {dimension_semantics = [#tpu.dimension_semantics<parallel>], iteration_bounds = array<i64: 1>, scalar_prefetch = 0 : i64, scratch_operands = 0 : i64, tpu.core_type = #tpu.core_type<tc>, window_params = [{transform_indices = @transform_0, window_bounds = array<i64: 8, 32>}, {pipeline_mode = #tpu.pipeline_mode<synchronous>, transform_indices = @transform_1, window_bounds = array<i64: 32, 16>}, {pipeline_mode = #tpu.pipeline_mode<synchronous>, transform_indices = @transform_2, window_bounds = array<i64: 1, 16>}, {pipeline_mode = #tpu.pipeline_mode<synchronous>, transform_indices = @transform_3, window_bounds = array<i64: 1, 16>}, {transform_indices = @transform_4, window_bounds = array<i64: 1, 1>}, {transform_indices = @transform_5, window_bounds = array<i64: 1, 8>}]} {
    %c0 = arith.constant 0 : index
    %c0_0 = arith.constant 0 : index
    %0 = vector.load %arg1[%c0, %c0_0] : memref<8x32xf32, #tpu.memory_space<vmem>>, vector<8x32xf32>
    %c0_1 = arith.constant 0 : index
    %c0_2 = arith.constant 0 : index
    %1 = vector.load %arg2[%c0_1, %c0_2] : memref<32x16xf32, #tpu.memory_space<vmem>>, vector<32x16xf32>
    %cst = arith.constant dense<0.000000e+00> : vector<8x16xf32>
    %2 = tpu.matmul %0, %1, %cst {dimension_numbers = #tpu.dot_dimension_numbers<[1], [0], [0], [1], [0, 0, 1, 1], [], []>} : vector<8x32xf32>, vector<32x16xf32>, vector<8x16xf32> -> vector<8x16xf32>
    %c0_3 = arith.constant 0 : index
    %c0_4 = arith.constant 0 : index
    %3 = vector.load %arg3[%c0_3, %c0_4] : memref<1x16xf32, #tpu.memory_space<vmem>>, vector<1x16xf32>
    %4 = vector.broadcast %3 : vector<1x16xf32> to vector<8x16xf32>
    %5 = arith.addf %2, %4 : vector<8x16xf32>
    %cst_5 = arith.constant 0.000000e+00 : f32
    %6 = vector.broadcast %cst_5 : f32 to vector<8x16xf32>
    %7 = arith.maximumf %5, %6 : vector<8x16xf32>
    %c0_6 = arith.constant 0 : index
    %c0_7 = arith.constant 0 : index
    %8 = vector.load %arg4[%c0_6, %c0_7] : memref<1x16xf32, #tpu.memory_space<vmem>>, vector<1x16xf32>
    "tpu.trace_start"() <{level = 10 : i32, message = "oh,nh->on"}> : () -> ()
    %cst_8 = arith.constant dense<0.000000e+00> : vector<1x8xf32>
    %9 = tpu.matmul %8, %7, %cst_8 {dimension_numbers = #tpu.dot_dimension_numbers<[1], [1], [0], [0], [0, 0, 1, 0], [], []>} : vector<1x16xf32>, vector<8x16xf32>, vector<1x8xf32> -> vector<1x8xf32>
    "tpu.trace_stop"() : () -> ()
    %c0_9 = arith.constant 0 : index
    %c0_10 = arith.constant 0 : index
    %10 = memref.load %arg5[%c0_9, %c0_10] : memref<1x1xf32, #tpu.memory_space<smem>>
    %11 = vector.broadcast %10 : f32 to vector<1x8xf32>
    %12 = arith.addf %9, %11 : vector<1x8xf32>
    %13 = arith.negf %12 : vector<1x8xf32>
    %14 = math.exp %13 : vector<1x8xf32>
    %cst_11 = arith.constant 1.000000e+00 : f32
    %15 = vector.broadcast %cst_11 : f32 to vector<1x8xf32>
    %16 = arith.addf %15, %14 : vector<1x8xf32>
    %17 = arith.divf %15, %16 : vector<1x8xf32>
    %c0_12 = arith.constant 0 : index
    %c0_13 = arith.constant 0 : index
    %18 = vector.load %arg6[%c0_12, %c0_13] : memref<1x8xf32, #tpu.memory_space<vmem>>, vector<1x8xf32>
    tpu.vector_store %arg6[%c0_12, %c0_13], %17 {strides = array<i32>} : memref<1x8xf32, #tpu.memory_space<vmem>>, vector<1x8xf32>,
    return
  }
  func.func @transform_0(%arg0: i32) -> (i32, i32) {
    %c0_i32 = arith.constant 0 : i32
    %c0_i32_0 = arith.constant 0 : i32
    return %arg0, %c0_i32 : i32, i32
  }
  func.func @transform_1(%arg0: i32) -> (i32, i32) {
    %c0_i32 = arith.constant 0 : i32
    %c0_i32_0 = arith.constant 0 : i32
    %c0_i32_1 = arith.constant 0 : i32
    return %c0_i32, %c0_i32_0 : i32, i32
  }
  func.func @transform_2(%arg0: i32) -> (i32, i32) {
    %c0_i32 = arith.constant 0 : i32
    %c0_i32_0 = arith.constant 0 : i32
    %c0_i32_1 = arith.constant 0 : i32
    return %c0_i32, %c0_i32_0 : i32, i32
  }
  func.func @transform_3(%arg0: i32) -> (i32, i32) {
    %c0_i32 = arith.constant 0 : i32
    %c0_i32_0 = arith.constant 0 : i32
    %c0_i32_1 = arith.constant 0 : i32
    return %c0_i32, %c0_i32_0 : i32, i32
  }
  func.func @transform_4(%arg0: i32) -> (i32, i32) {
    %c0_i32 = arith.constant 0 : i32
    %c0_i32_0 = arith.constant 0 : i32
    %c0_i32_1 = arith.constant 0 : i32
    return %c0_i32, %c0_i32_0 : i32, i32
  }
  func.func @transform_5(%arg0: i32) -> (i32, i32) {
    %c0_i32 = arith.constant 0 : i32
    %c0_i32_0 = arith.constant 0 : i32
    return %arg0, %c0_i32 : i32, i32
  }
}

</mosaic_0001>

<llo_original>
// kernel: tpu_custom_call.1
$region0: #{tpu_custom_call.1}
  #allocation0 [shape = 'u32[]', space=smem, size = 0x4, offset = 0x4, fixed_abs, tag = 'smem constant byte address 0x4 - core index']
  #allocation1 [shape = 'u32[144,128]{1,0:T(1,128)}', space=vmem, size = 0x12000, scoped, tag = 'internal scratch']
  #allocation2 [shape = 'f32[1,1]{1,0:T(1,128)S(6)}', space=smem, size = 0x200, scoped, tag = 'scoped memory for tpu_custom_call.1']
  %s0 = inlined_call_operand.vmem [shape: f32[8,32], index: 0, kind: input, shape index: {}]
  %s1 = inlined_call_operand.vmem [shape: f32[32,16], index: 1, kind: input, shape index: {}]
  %s2 = inlined_call_operand.vmem [shape: f32[1,16], index: 2, kind: input, shape index: {}]
  %s3 = inlined_call_operand.vmem [shape: f32[1,16], index: 3, kind: input, shape index: {}]
  %s4 = inlined_call_operand.<no memory space> [shape: f32[1,1], index: 4, kind: input, shape index: {}]
  %s5 = inlined_call_operand.hbm [shape: f32[1,8], index: 5, kind: output, shape index: {}]
  %s6 = sld [smem:[#allocation0]]
  $region30: #{tpu_custom_call.1} parent=0
    _
  %s8 = ssub.s32 1, %s6
  %s9 = scalar_select 0, %s8, %s6
  %10 = sst [smem:[#allocation2]] %s4
  $region1: #{tpu_custom_call.1} parent=0
    #allocation3 [shape = 'u8[512]{0}', space=vmem, size = 0x400, scoped, tag = 'output window, operand 0, single buffered']
    #allocation4 [shape = 's32[1]{0}', space=sflag, size = 0x4, scoped, tag = 'scoped memory for tpu_custom_call.1']
    %11 = vsyncpa [#allocation4], 0
    // Predicated region
    $region2: #{tpu_custom_call.1} parent=1 // pred_check
      _
    $region3: #{tpu_custom_call.1} parent=1 // pred_check_branch
      %13 = sbr.rel (0) target = $region5
    $region4: #{tpu_custom_call.1} parent=1 // pred_region
      _
    $region5: #{tpu_custom_call.1} parent=1 // pred_fallthru
      _
    // Predicated region
    $region6: #{tpu_custom_call.1} parent=1 // pred_check
      _
    $region7: #{tpu_custom_call.1} parent=1 // pred_check_branch
      %15 = sbr.rel (0) target = $region9
    $region8: #{tpu_custom_call.1} parent=1 // pred_region
      _
    $region9: #{tpu_custom_call.1} parent=1 // pred_fallthru
      _
    // Predicated region
    $region10: #{tpu_custom_call.1} parent=1 // pred_check
      _
    $region11: #{tpu_custom_call.1} parent=1 // pred_check_branch
      %17 = sbr.rel (0) target = $region13
    $region12: #{tpu_custom_call.1} parent=1 // pred_region
      _
    $region13: #{tpu_custom_call.1} parent=1 // pred_fallthru
      _
    // Predicated region
    $region14: #{tpu_custom_call.1} parent=1 // pred_check
      _
    $region15: #{tpu_custom_call.1} parent=1 // pred_check_branch
      %19 = sbr.rel (0) target = $region17
    $region16: #{tpu_custom_call.1} parent=1 // pred_region
      _
    $region17: #{tpu_custom_call.1} parent=1 // pred_fallthru
      _
    // Predicated region
    $region18: #{tpu_custom_call.1} parent=1 // pred_check
      _
    $region19: #{tpu_custom_call.1} parent=1 // pred_check_branch
      %21 = sbr.rel (0) target = $region21
    $region20: #{tpu_custom_call.1} parent=1 // pred_region
      _
    $region21: #{tpu_custom_call.1} parent=1 // pred_fallthru
      _
    %v22 = vld [vmem:[%s0] sm:$0xff]
    %v23 = vld [vmem:[%s1] sm:$0xff]
    %v24 = vld [vmem:[%s1 + $0x8] sm:$0xff]
    %v25 = vld [vmem:[%s1 + $0x10] sm:$0xff]
    %v26 = vld [vmem:[%s1 + $0x18] sm:$0xff]
    %v27 = vld [vmem:[%s2] sm:$0x1]
    %v29 = vlaneseq
    %v30 = vshrl.u32 %v29, 7
    %v31 = vsub.s32 0, %v30
    %v32 = vrot.slane %v27, %v31
    %vm34 = vcmask 261120
    %v36 = vsel %vm34, %v22, 0
    %38 = vmatprep.subr.mxu0 0.0
    %39 = vmatpush1.msra.mxu0 0.0
    %40 = vmatprep.subr.mxu0 0.0
    %41 = vmatpush1.msra.mxu0 0.0
    %42 = vmatprep.subr.mxu0 0.0
    %43 = vmatpush1.msra.mxu0 0.0
    %44 = vmatprep.subr.mxu0 0.0
    %45 = vmatpush1.msra.mxu0 0.0
    %46 = vmatprep.subr.mxu0 0.0
    %47 = vmatpush1.msra.mxu0 0.0
    %48 = vmatprep.subr.mxu0 0.0
    %49 = vmatpush1.msra.mxu0 0.0
    %50 = vmatprep.subr.mxu0 0.0
    %51 = vmatpush1.msra.mxu0 0.0
    %52 = vmatprep.subr.mxu0 0.0
    %53 = vmatpush1.msra.mxu0 0.0
    %54 = vmatprep.subr.mxu0 0.0
    %55 = vmatpush1.msra.mxu0 0.0
    %56 = vmatprep.subr.mxu0 0.0
    %57 = vmatpush1.msra.mxu0 0.0
    %58 = vmatprep.subr.mxu0 0.0
    %59 = vmatpush1.msra.mxu0 0.0
    %60 = vmatprep.subr.mxu0 0.0
    %61 = vmatpush1.msra.mxu0 0.0
    %62 = vmatprep.subr.mxu0 0.0
    %63 = vmatpush1.msra.mxu0 %v26
    %64 = vmatprep.subr.mxu0 0.0
    %65 = vmatpush1.msra.mxu0 %v25
    %66 = vmatprep.subr.mxu0 0.0
    %67 = vmatpush1.msra.mxu0 %v24
    %68 = vmatprep.subr.mxu0 0.0
    %69 = vmatpush1.msra.mxu0 %v23
    %70 = vmatprep.subr.mxu0 0.0
    %71 = vmatpush2.msra.mxu0 0.0
    %72 = vmatprep.subr.mxu0 0.0
    %73 = vmatpush2.msra.mxu0 0.0
    %74 = vmatprep.subr.mxu0 0.0
    %75 = vmatpush2.msra.mxu0 0.0
    %76 = vmatprep.subr.mxu0 0.0
    %77 = vmatpush2.msra.mxu0 0.0
    %78 = vmatprep.subr.mxu0 0.0
    %79 = vmatpush2.msra.mxu0 0.0
    %80 = vmatprep.subr.mxu0 0.0
    %81 = vmatpush2.msra.mxu0 0.0
    %82 = vmatprep.subr.mxu0 0.0
    %83 = vmatpush2.msra.mxu0 0.0
    %84 = vmatprep.subr.mxu0 0.0
    %85 = vmatpush2.msra.mxu0 0.0
    %86 = vmatprep.subr.mxu0 0.0
    %87 = vmatpush2.msra.mxu0 0.0
    %88 = vmatprep.subr.mxu0 0.0
    %89 = vmatpush2.msra.mxu0 0.0
    %90 = vmatprep.subr.mxu0 0.0
    %91 = vmatpush2.msra.mxu0 0.0
    %92 = vmatprep.subr.mxu0 0.0
    %93 = vmatpush2.msra.mxu0 0.0
    %94 = vmatprep.subr.mxu0 0.0
    %95 = vmatpush2.msra.mxu0 0.0
    %96 = vmatprep.subr.mxu0 0.0
    %97 = vmatpush2.msra.mxu0 0.0
    %98 = vmatprep.subr.mxu0 0.0
    %99 = vmatpush2.msra.mxu0 0.0
    %100 = vmatprep.subr.mxu0 0.0
    %101 = vmatpush2.msra.mxu0 0.0
    %102 = vmatprep.mubr.f32.mxu0 0.0
    %103 = vmatmul.mubr.f32.gmra.mxu0 %v36
    %v104 = vpop.f32.mrf.mxu0
    %v105 = vadd.f32 %v32, %v104
    %v106 = vpop.f32.mrf.mxu0
    %107 = vdwg.mxu0
    %v108 = vmax.f32 %v105, 0.0
    %v109 = vld [vmem:[%s3] sm:$0x1]
    %s110 = sld [smem:[#allocation2]]
    %v111 = vstv %s110
    %vm112 = vcmask 130048
    %v114 = vsel %vm112, %v109, 0
    %v117 = vsel %vm112, %v108, 0
    %119 = vmatprep.subr.mxu0 0.0
    %120 = vmatpush1.xpose.msra.mxu0 0.0
    %121 = vmatprep.subr.mxu0 0.0
    %122 = vmatpush1.xpose.msra.mxu0 0.0
    %123 = vmatprep.subr.mxu0 0.0
    %124 = vmatpush1.xpose.msra.mxu0 0.0
    %125 = vmatprep.subr.mxu0 0.0
    %126 = vmatpush1.xpose.msra.mxu0 0.0
    %127 = vmatprep.subr.mxu0 0.0
    %128 = vmatpush1.xpose.msra.mxu0 0.0
    %129 = vmatprep.subr.mxu0 0.0
    %130 = vmatpush1.xpose.msra.mxu0 0.0
    %131 = vmatprep.subr.mxu0 0.0
    %132 = vmatpush1.xpose.msra.mxu0 0.0
    %133 = vmatprep.subr.mxu0 0.0
    %134 = vmatpush1.xpose.msra.mxu0 0.0
    %135 = vmatprep.subr.mxu0 0.0
    %136 = vmatpush1.xpose.msra.mxu0 0.0
    %137 = vmatprep.subr.mxu0 0.0
    %138 = vmatpush1.xpose.msra.mxu0 0.0
    %139 = vmatprep.subr.mxu0 0.0
    %140 = vmatpush1.xpose.msra.mxu0 0.0
    %141 = vmatprep.subr.mxu0 0.0
    %142 = vmatpush1.xpose.msra.mxu0 0.0
    %143 = vmatprep.subr.mxu0 0.0
    %144 = vmatpush1.xpose.msra.mxu0 0.0
    %145 = vmatprep.subr.mxu0 0.0
    %146 = vmatpush1.xpose.msra.mxu0 0.0
    %147 = vmatprep.subr.mxu0 0.0
    %148 = vmatpush1.xpose.msra.mxu0 0.0
    %149 = vmatprep.subr.mxu0 0.0
    %150 = vmatpush1.xpose.msra.mxu0 %v117
    %151 = vmatprep.subr.mxu0 0.0
    %152 = vmatpush2.xpose.msra.mxu0 0.0
    %153 = vmatprep.subr.mxu0 0.0
    %154 = vmatpush2.xpose.msra.mxu0 0.0
    %155 = vmatprep.subr.mxu0 0.0
    %156 = vmatpush2.xpose.msra.mxu0 0.0
    %157 = vmatprep.subr.mxu0 0.0
    %158 = vmatpush2.xpose.msra.mxu0 0.0
    %159 = vmatprep.subr.mxu0 0.0
    %160 = vmatpush2.xpose.msra.mxu0 0.0
    %161 = vmatprep.subr.mxu0 0.0
    %162 = vmatpush2.xpose.msra.mxu0 0.0
    %163 = vmatprep.subr.mxu0 0.0
    %164 = vmatpush2.xpose.msra.mxu0 0.0
    %165 = vmatprep.subr.mxu0 0.0
    %166 = vmatpush2.xpose.msra.mxu0 0.0
    %167 = vmatprep.subr.mxu0 0.0
    %168 = vmatpush2.xpose.msra.mxu0 0.0
    %169 = vmatprep.subr.mxu0 0.0
    %170 = vmatpush2.xpose.msra.mxu0 0.0
    %171 = vmatprep.subr.mxu0 0.0
    %172 = vmatpush2.xpose.msra.mxu0 0.0
    %173 = vmatprep.subr.mxu0 0.0
    %174 = vmatpush2.xpose.msra.mxu0 0.0
    %175 = vmatprep.subr.mxu0 0.0
    %176 = vmatpush2.xpose.msra.mxu0 0.0
    %177 = vmatprep.subr.mxu0 0.0
    %178 = vmatpush2.xpose.msra.mxu0 0.0
    %179 = vmatprep.subr.mxu0 0.0
    %180 = vmatpush2.xpose.msra.mxu0 0.0
    %181 = vmatprep.subr.mxu0 0.0
    %182 = vmatpush2.xpose.msra.mxu0 0.0
    %183 = vmatprep.mubr.f32.mxu0 0.0
    %184 = vmatmul.mubr.f32.gmra.mxu0 %v114
    %v185 = vpop.f32.mrf.mxu0
    %v186 = vadd.f32 %v111, %v185
    %v187 = vpop.f32.mrf.mxu0
    %188 = vdwg.mxu0
    %v189 = vxor.u32 %v186, 2147483648
    %v190 = vmul.f32 %v189, 1.442695
    %v191 = vpow.pop %v190
    %v192 = vadd.f32 %v191, 1.0
    %v193 = vrcp.pop %v192
    %v194 = vmul.f32 1.0, %v193
    %vm195 = vcmask 57344
    %196 = vst.msk [vmem:[#allocation3] sm:$0x1] %vm195, %v194
    // Predicated region
    $region22: #{tpu_custom_call.1} parent=1 // pred_check
      _
    $region23: #{tpu_custom_call.1} parent=1 // pred_check_branch
      %198 = sbr.rel (0) target = $region25
    $region24: #{tpu_custom_call.1} parent=1 // pred_region
      %s200 = ssub.s32 16, 16
      %201 = vsyncadd [#allocation4], %s200
      %s203 = sshll.u32 [#allocation3], 4
      %s204 = int_to_ptr.vmem [resolvable:$true] %s203
      %206 = dma.vmem_to_hbm [thread:$0]  %s204, 16, %s5, [#allocation4]
    $region25: #{tpu_custom_call.1} parent=1 // pred_fallthru
      _
    // Predicated region
    $region26: #{tpu_custom_call.1} parent=1 // pred_check
      _
    $region27: #{tpu_custom_call.1} parent=1 // pred_check_branch
      %208 = sbr.rel (0) target = $region29
    $region28: #{tpu_custom_call.1} parent=1 // pred_region
      %209 = dma.done [#allocation4], 16
    $region29: #{tpu_custom_call.1} parent=1 // pred_fallthru
      _
    %210 = vsyncpa [#allocation4], 1

</llo_original>
